<compile_context>
chip_gen: v6e
topology: v6e:2x2x1
jax: 0.10.0
libtpu: 0.0.40
codegen_flags: <defaults>
</compile_context>

<pallas_src>
import math

import jax
import jax.numpy as jnp
from jax import lax
from jax.experimental import pallas as pl
from jax.experimental.pallas import tpu as pltpu


def _prenorm_kernel(x_ref, w_ref, b_ref, o_ref):
    # x_ref: (C, TL)             w_ref: (C_out_p, C)   [already includes g*sqrt(C)]
    # b_ref: (C_out_p, 1) f32    o_ref: (C_out_p, TL)
    x = x_ref[...]                                     # (C, TL) in x dtype
    xf = x.astype(jnp.float32)

    # Per-lane inverse L2 norm over channels (f32, EUP rsqrt, eps^2 clamp):
    #   rsqrt(max(sum_sq, 1e-24)) == 1 / max(||x||, 1e-12)
    sq_sum = jnp.sum(xf * xf, axis=0, keepdims=True)   # (1, TL) f32
    inv_l2 = lax.rsqrt(jnp.maximum(sq_sum, 1e-24))     # (1, TL) f32

    c_out_p, c = w_ref.shape                           # static Python ints
    if c_out_p > c:
        # Cheaper to apply the normalization on the (C, TL) input side.
        xn = (xf * inv_l2).astype(w_ref.dtype)
        out = jnp.dot(w_ref[...], xn, preferred_element_type=jnp.float32)
        out = out + b_ref[...]
    else:
        # Matmul on raw x, scale the (C_out, TL) result per lane.
        out = jnp.dot(w_ref[...], x, preferred_element_type=jnp.float32)
        out = out * inv_l2 + b_ref[...]
    o_ref[...] = out.astype(o_ref.dtype)


def prenorm(x, g, w, b, *, tile_pair_bytes=2 << 20, tl_cap=8192):
    """PreNorm(dim, Conv1d(dim, dim_out, kernel_size=1)) forward.

    x: (B, C, L); g: (1, C, 1) RMSNorm gain; w: (C_out, C); b: (C_out,) or (C_out, 1).
    Returns (B, C_out, L) in x.dtype.
    """
    B, C, L = x.shape
    C_out = w.shape[0]
    itemsize = jnp.dtype(x.dtype).itemsize

    # Fold the RMSNorm gain (per *input* channel) and sqrt(C) into the weights.
    gain = g.reshape(C).astype(jnp.float32) * math.sqrt(C)
    w_eff = w.astype(jnp.float32) * gain[None, :]
    b_eff = b.astype(jnp.float32).reshape(C_out, 1)

    # Sublane-align the output channel dim (zero rows sliced off afterwards).
    C_out_p = ((C_out + 7) // 8) * 8
    if C_out_p != C_out:
        w_eff = jnp.pad(w_eff, ((0, C_out_p - C_out), (0, 0)))
        b_eff = jnp.pad(b_eff, ((0, C_out_p - C_out), (0, 0)))
    w_eff = w_eff.astype(x.dtype)          # bf16 inputs keep a bf16 DMA/MXU path

    # ---- tile-size selection (C-dependent, lane-dense) ----------------------
    l_128 = ((L + 127) // 128) * 128
    denom = (C + C_out_p) * itemsize
    tl = (max(tile_pair_bytes // denom, 128) // 128) * 128
    tl = max(128, min(tl, tl_cap, l_128))
    # v7x shards the "parallel" grid axes over 2 TensorCores: make sure a
    # B == 1 launch still yields >= 2 grid steps along L when possible.
    if B == 1 and (l_128 + tl - 1) // tl < 2 and l_128 >= 256:
        tl = max(128, ((l_128 // 2 + 127) // 128) * 128)

    # ---- VMEM budget: Pallas double-buffers every operand by default --------
    w_bytes = C_out_p * C * jnp.dtype(w_eff.dtype).itemsize
    b_bytes = C_out_p * 4

    def _need(tl_):
        return 2 * ((C + C_out_p) * tl_ * itemsize) + 2 * (w_bytes + b_bytes)

    try:
        phys_vmem = int(pltpu.get_tpu_info().vmem_capacity_bytes)
    except Exception:
        phys_vmem = 64 << 20               # v7x floor is the safe assumption
    budget = phys_vmem * 3 // 4
    while _need(tl) + (4 << 20) > budget and tl > 128:
        tl = max(128, (tl // 2 // 128) * 128)

    vmem_need = _need(tl)
    vmem_limit = min(vmem_need + (4 << 20), budget)
    vmem_limit = max(vmem_limit, vmem_need + (2 << 20), 16 << 20)

    n_l = pl.cdiv(L, tl)

    out = pl.pallas_call(
        _prenorm_kernel,
        out_shape=jax.ShapeDtypeStruct((B, C_out_p, L), x.dtype),
        grid_spec=pltpu.PrefetchScalarGridSpec(
            num_scalar_prefetch=0,
            grid=(B, n_l),
            in_specs=[
                pl.BlockSpec((pl.Squeezed(), C, tl), lambda bi, li: (bi, 0, li)),
                pl.BlockSpec((C_out_p, C), lambda bi, li: (0, 0)),
                pl.BlockSpec((C_out_p, 1), lambda bi, li: (0, 0)),
            ],
            out_specs=pl.BlockSpec(
                (pl.Squeezed(), C_out_p, tl), lambda bi, li: (bi, 0, li)),
        ),
        compiler_params=pltpu.CompilerParams(
            dimension_semantics=("parallel", "parallel"),
            vmem_limit_bytes=int(vmem_limit),
        ),
    )(x, w_eff, b_eff)

    if C_out_p != C_out:
        out = out[:, :C_out, :]
    return out


def prenorm_ref(x, g, w, b):
    # Pure-JAX reference mirroring the PyTorch module exactly (f32 math).
    c = x.shape[1]
    xf = x.astype(jnp.float32)
    l2 = jnp.sqrt(jnp.sum(xf * xf, axis=1, keepdims=True))
    l2 = jnp.maximum(l2, 1e-12)
    y = xf / l2 * g.astype(jnp.float32) * (c ** 0.5)
    out = jnp.einsum("oc,bcl->bol", w.astype(jnp.float32), y)
    return out + b.astype(jnp.float32).reshape(1, -1, 1)


if __name__ == "__main__":
    key = jax.random.PRNGKey(0)
    kx, kw, kb, kx2, kw2, kb2 = jax.random.split(key, 6)

    # ---- f32 check: dim=8, fn = Conv1d(8, 8, kernel_size=1) -----------------
    B, C, L, C_out = 2, 8, 16, 8
    x = jax.random.normal(kx, (B, C, L), dtype=jnp.float32)
    g = jnp.ones((1, C, 1), dtype=jnp.float32)      # nn.Parameter(torch.ones(1, dim, 1))
    w = jax.random.normal(kw, (C_out, C), dtype=jnp.float32) * 0.1
    b = jax.random.normal(kb, (C_out, 1), dtype=jnp.float32) * 0.1

    out = jax.block_until_ready(prenorm(x, g, w, b))
    ref = prenorm_ref(x, g, w, b)
    assert out.shape == (B, C_out, L)
    assert jnp.allclose(out, ref, atol=1e-4, rtol=1e-4), "f32 mismatch vs reference"

    # ---- bf16 path: ragged L (boundary block), C_out > C, B == 1 ------------
    B2, C2, L2, C2_out = 1, 32, 200, 64
    x2 = jax.random.normal(kx2, (B2, C2, L2), dtype=jnp.float32).astype(jnp.bfloat16)
    g2 = jnp.ones((1, C2, 1), dtype=jnp.float32)
    w2 = jax.random.normal(kw2, (C2_out, C2), dtype=jnp.float32) * 0.1
    b2 = jax.random.normal(kb2, (C2_out, 1), dtype=jnp.float32) * 0.1

    out2 = jax.block_until_ready(prenorm(x2, g2, w2, b2))
    ref2 = prenorm_ref(x2, g2, w2, b2)
    assert out2.shape == (B2, C2_out, L2)
    assert out2.dtype == jnp.bfloat16
    assert jnp.allclose(out2.astype(jnp.float32), ref2, atol=5e-2, rtol=5e-2), \
        "bf16 mismatch vs reference"

    print("KERNEL_OK")
</pallas_src>

<mosaic_0001>
module attributes {stable_mosaic.version = 11 : i64} {
  func.func @_prenorm_kernel(%arg0: i32, %arg1: i32, %arg2: memref<1x8x128xf32, #tpu.memory_space<vmem>>, %arg3: memref<8x8xf32, #tpu.memory_space<vmem>>, %arg4: memref<8x1xf32, #tpu.memory_space<vmem>>, %arg5: memref<1x8x128xf32, #tpu.memory_space<vmem>>) attributes {dimension_semantics = [#tpu.dimension_semantics<parallel>, #tpu.dimension_semantics<parallel>], iteration_bounds = array<i64: 2, 1>, scalar_prefetch = 0 : i64, scratch_operands = 0 : i64, tpu.core_type = #tpu.core_type<tc>, window_params = [{transform_indices = @transform_0, window_bounds = array<i64: 1, 8, 128>}, {pipeline_mode = #tpu.pipeline_mode<synchronous>, transform_indices = @transform_1, window_bounds = array<i64: 8, 8>}, {pipeline_mode = #tpu.pipeline_mode<synchronous>, transform_indices = @transform_2, window_bounds = array<i64: 8, 1>}, {transform_indices = @transform_3, window_bounds = array<i64: 1, 8, 128>}]} {
    %c0 = arith.constant 0 : index
    %c0_0 = arith.constant 0 : index
    %c0_1 = arith.constant 0 : index
    %0 = vector.load %arg2[%c0, %c0_0, %c0_1] : memref<1x8x128xf32, #tpu.memory_space<vmem>>, vector<1x8x128xf32>
    %1 = vector.shape_cast %0 : vector<1x8x128xf32> to vector<8x128xf32>
    %2 = arith.mulf %1, %1 : vector<8x128xf32>
    %cst = arith.constant dense<0.000000e+00> : vector<128xf32>
    %3 = vector.multi_reduction <add>, %2, %cst [0] : vector<8x128xf32> to vector<128xf32>
    %4 = vector.shape_cast %3 : vector<128xf32> to vector<1x128xf32>
    %cst_2 = arith.constant 1.000000e-24 : f32
    %5 = vector.broadcast %cst_2 : f32 to vector<1x128xf32>
    %6 = arith.maximumf %4, %5 : vector<1x128xf32>
    %7 = math.rsqrt %6 : vector<1x128xf32>
    %c0_3 = arith.constant 0 : index
    %c0_4 = arith.constant 0 : index
    %8 = vector.load %arg3[%c0_3, %c0_4] : memref<8x8xf32, #tpu.memory_space<vmem>>, vector<8x8xf32>
    %cst_5 = arith.constant dense<0.000000e+00> : vector<8x128xf32>
    %9 = tpu.matmul %8, %1, %cst_5 {dimension_numbers = #tpu.dot_dimension_numbers<[1], [0], [0], [1], [0, 0, 1, 1], [], []>} : vector<8x8xf32>, vector<8x128xf32>, vector<8x128xf32> -> vector<8x128xf32>
    %10 = vector.broadcast %7 : vector<1x128xf32> to vector<8x128xf32>
    %11 = arith.mulf %9, %10 : vector<8x128xf32>
    %c0_6 = arith.constant 0 : index
    %c0_7 = arith.constant 0 : index
    %12 = vector.load %arg4[%c0_6, %c0_7] : memref<8x1xf32, #tpu.memory_space<vmem>>, vector<8x1xf32>
    %13 = vector.broadcast %12 : vector<8x1xf32> to vector<8x128xf32>
    %14 = arith.addf %11, %13 : vector<8x128xf32>
    %c0_8 = arith.constant 0 : index
    %c0_9 = arith.constant 0 : index
    %c0_10 = arith.constant 0 : index
    %15 = vector.load %arg5[%c0_8, %c0_9, %c0_10] : memref<1x8x128xf32, #tpu.memory_space<vmem>>, vector<1x8x128xf32>
    %16 = vector.shape_cast %15 : vector<1x8x128xf32> to vector<8x128xf32>
    %17 = vector.shape_cast %14 : vector<8x128xf32> to vector<1x8x128xf32>
    tpu.vector_store %arg5[%c0_8, %c0_9, %c0_10], %17 {strides = array<i32>} : memref<1x8x128xf32, #tpu.memory_space<vmem>>, vector<1x8x128xf32>,
    return
  }
  func.func @transform_0(%arg0: i32, %arg1: i32) -> (i32, i32, i32) {
    %c0_i32 = arith.constant 0 : i32
    %c0_i32_0 = arith.constant 0 : i32
    return %arg0, %c0_i32, %arg1 : i32, i32, i32
  }
  func.func @transform_1(%arg0: i32, %arg1: i32) -> (i32, i32) {
    %c0_i32 = arith.constant 0 : i32
    %c0_i32_0 = arith.constant 0 : i32
    %c0_i32_1 = arith.constant 0 : i32
    return %c0_i32, %c0_i32_0 : i32, i32
  }
  func.func @transform_2(%arg0: i32, %arg1: i32) -> (i32, i32) {
    %c0_i32 = arith.constant 0 : i32
    %c0_i32_0 = arith.constant 0 : i32
    %c0_i32_1 = arith.constant 0 : i32
    return %c0_i32, %c0_i32_0 : i32, i32
  }
  func.func @transform_3(%arg0: i32, %arg1: i32) -> (i32, i32, i32) {
    %c0_i32 = arith.constant 0 : i32
    %c0_i32_0 = arith.constant 0 : i32
    return %arg0, %c0_i32, %arg1 : i32, i32, i32
  }
}

</mosaic_0001>

<llo_original>
// kernel: tpu_custom_call.1
$region0: #{tpu_custom_call.1}
  #allocation0 [shape = 'u32[]', space=smem, size = 0x4, offset = 0x4, fixed_abs, tag = 'smem constant byte address 0x4 - core index']
  #allocation1 [shape = 'u32[144,128]{1,0:T(1,128)}', space=vmem, size = 0x12000, scoped, tag = 'internal scratch']
  %s0 = inlined_call_operand.hbm [shape: f32[2,8,16], index: 0, kind: input, shape index: {}]
  %s1 = inlined_call_operand.vmem [shape: f32[8,8], index: 1, kind: input, shape index: {}]
  %s2 = inlined_call_operand.vmem [shape: f32[8,1], index: 2, kind: input, shape index: {}]
  %s3 = inlined_call_operand.hbm [shape: f32[2,8,16], index: 3, kind: output, shape index: {}]
  %s4 = sld [smem:[#allocation0]]
  $region49: #{tpu_custom_call.1} parent=0
    _
  %s6 = ssub.s32 1, %s4
  %s7 = scalar_select 0, %s6, %s4
  $region1: #{tpu_custom_call.1} parent=0
    #allocation2 [shape = 'u8[8192]{0}', space=vmem, size = 0x2000, scoped, tag = 'input window, operand 0']
    #allocation3 [shape = 's32[2]{0}', space=sflag, size = 0x8, scoped, tag = 'scoped memory for tpu_custom_call.1']
    #allocation4 [shape = 's32[2]{0}', space=sflag, size = 0x8, scoped, tag = 'scoped memory for tpu_custom_call.1']
    #allocation5 [shape = 'u8[8192]{0}', space=vmem, size = 0x2000, scoped, tag = 'output window, operand 0']
    %8 = vsyncpa [#allocation3], 0
    %s9 = scalar_lea.sflag [#allocation3], 1
    %10 = vsyncpa %s9, 0
    %11 = vsyncpa [#allocation4], 0
    %s12 = scalar_lea.sflag [#allocation4], 1
    %13 = vsyncpa %s12, 0
    loop: start=0, step=1, limit=4
    $region2: #{tpu_custom_call.1} parent=1 // loop_pre_header
      _
    $region3: #{tpu_custom_call.1} parent=1 // loop_header
      %s15 = sphi 0, %s19
      %p16 = scmp.ge.s32.totalorder %s15, 4
      %s22 = sphi 0, %s34
      %s23 = sphi 0, %s30
      %s24 = sphi 0, %s22
      %s25 = sphi 0, %s23
      %s26 = sphi 0, %s24
      %s27 = sphi 0, %s25
      %s39 = sphi 0, %s41
      %s42 = sphi 0, %s39
      %s43 = sphi 0, %s42
      %s59 = sphi 0, %s43
      %s63 = sphi 0, %s63
      %s65 = sphi 0, %s63
      %s66 = sphi 0, %s65
      %s80 = sphi 0, %s66
      %s84 = sphi 0, %s84
      %s86 = sphi 0, %s84
      %s87 = sphi 0, %s86
      %s101 = sphi 0, %s87
      %s109 = sphi 0, %s111
      %s112 = sphi 0, %s109
      %s113 = sphi 0, %s112
      %s129 = sphi 0, %s113
    $region4: #{tpu_custom_call.1} parent=1 // loop_header_branch
      %18 = sbr.rel (%p16) target = $region8
    $region5: #{tpu_custom_call.1} parent=1 // loop_body
      %s20 = ssub.s32 %s15, 1
      %s21 = ssub.s32 %s15, 2
      %s28 = sadd.s32 1, %s23
      %p29 = scmp.ge.s32.totalorder %s28, 1
      %s30 = scalar_select %p29, 0, %s28
      %s31 = sadd.s32 1, %s22
      %s32 = scalar_select %p29, %s31, %s22
      %p33 = scmp.ge.s32.totalorder %s32, 2
      %s34 = scalar_select %p33, 0, %s32
      %s35 = ssub.s32 %s22, %s34
      %s36 = ssub.s32 %s23, %s30
      %s37 = sor.u32 %s35, %s36
      %p38 = scmp.eq.s32.totalorder %s37, 0
      %s40 = sadd.s32 %s39, 1
      %s41 = scalar_select %p38, %s39, %s40
      %p44 = pneg %p38
      %p45 = scmp.eq.s32.totalorder %s15, 1
      %p46 = por %p44, %p45
      %p47 = scmp.ne.s32.totalorder %s39, %s42
      %p48 = scmp.eq.s32.totalorder %s15, 0
      %p49 = por %p47, %p48
      %p50 = scmp.ne.s32.totalorder %s39, %s42
      %p51 = scmp.eq.s32.totalorder %s20, 1
      %p52 = por %p50, %p51
      %p53 = scmp.ne.s32.totalorder %s42, %s43
      %p54 = scmp.eq.s32.totalorder %s20, 0
      %p55 = por %p53, %p54
      %p56 = scmp.ne.s32.totalorder %s42, %s43
      %p57 = scmp.eq.s32.totalorder %s21, 1
      %p58 = por %p56, %p57
      %p60 = scmp.ne.s32.totalorder %s43, %s59
      %p61 = scmp.eq.s32.totalorder %s21, 0
      %p62 = por %p60, %p61
      %s64 = sadd.s32 %s63, 1
      %p67 = scmp.eq.s32.totalorder %s15, 1
      %p68 = scmp.ne.s32.totalorder %s63, %s65
      %p69 = scmp.eq.s32.totalorder %s15, 0
      %p70 = por %p68, %p69
      %p71 = scmp.ne.s32.totalorder %s63, %s65
      %p72 = scmp.eq.s32.totalorder %s20, 1
      %p73 = por %p71, %p72
      %p74 = scmp.ne.s32.totalorder %s65, %s66
      %p75 = scmp.eq.s32.totalorder %s20, 0
      %p76 = por %p74, %p75
      %p77 = scmp.ne.s32.totalorder %s65, %s66
      %p78 = scmp.eq.s32.totalorder %s21, 1
      %p79 = por %p77, %p78
      %p81 = scmp.ne.s32.totalorder %s66, %s80
      %p82 = scmp.eq.s32.totalorder %s21, 0
      %p83 = por %p81, %p82
      %s85 = sadd.s32 %s84, 1
      %p88 = scmp.eq.s32.totalorder %s15, 1
      %p89 = scmp.ne.s32.totalorder %s84, %s86
      %p90 = scmp.eq.s32.totalorder %s15, 0
      %p91 = por %p89, %p90
      %p92 = scmp.ne.s32.totalorder %s84, %s86
      %p93 = scmp.eq.s32.totalorder %s20, 1
      %p94 = por %p92, %p93
      %p95 = scmp.ne.s32.totalorder %s86, %s87
      %p96 = scmp.eq.s32.totalorder %s20, 0
      %p97 = por %p95, %p96
      %p98 = scmp.ne.s32.totalorder %s86, %s87
      %p99 = scmp.eq.s32.totalorder %s21, 1
      %p100 = por %p98, %p99
      %p102 = scmp.ne.s32.totalorder %s87, %s101
      %p103 = scmp.eq.s32.totalorder %s21, 0
      %p104 = por %p102, %p103
      %s105 = ssub.s32 %s22, %s34
      %s106 = ssub.s32 %s23, %s30
      %s107 = sor.u32 %s105, %s106
      %p108 = scmp.eq.s32.totalorder %s107, 0
      %s110 = sadd.s32 %s109, 1
      %s111 = scalar_select %p108, %s109, %s110
      %p114 = pneg %p108
      %p115 = scmp.eq.s32.totalorder %s15, 1
      %p116 = por %p114, %p115
      %p117 = scmp.ne.s32.totalorder %s109, %s112
      %p118 = scmp.eq.s32.totalorder %s15, 0
      %p119 = por %p117, %p118
      %p120 = scmp.ne.s32.totalorder %s109, %s112
      %p121 = scmp.eq.s32.totalorder %s20, 1
      %p122 = por %p120, %p121
      %p123 = scmp.ne.s32.totalorder %s112, %s113
      %p124 = scmp.eq.s32.totalorder %s20, 0
      %p125 = por %p123, %p124
      %p126 = scmp.ne.s32.totalorder %s112, %s113
      %p127 = scmp.eq.s32.totalorder %s21, 1
      %p128 = por %p126, %p127
      %p130 = scmp.ne.s32.totalorder %s113, %s129
      %p131 = scmp.eq.s32.totalorder %s21, 0
      %p132 = por %p130, %p131
      %p133 = scmp.le.s32.totalorder 1, %s15
      %p134 = scmp.lt.s32.totalorder %s15, 3
      %p135 = pnand %p133, %p134
      %p136 = pneg %p135
      // Predicated region
      $region9: #{tpu_custom_call.1} parent=5 // pred_check
        _
      $region10: #{tpu_custom_call.1} parent=5 // pred_check_branch
        %138 = sbr.rel (%p135) target = $region12
      $region11: #{tpu_custom_call.1} parent=5 // pred_region
        %s139 = ssub.s32 %s15, 1
        // Predicated region
        $region13: #{tpu_custom_call.1} parent=11 // pred_check
          %p140 = pneg %p76
        $region14: #{tpu_custom_call.1} parent=11 // pred_check_branch
          %142 = sbr.rel (%p140) target = $region16
        $region15: #{tpu_custom_call.1} parent=11 // pred_region
          _
        $region16: #{tpu_custom_call.1} parent=11 // pred_fallthru
          _
        // Predicated region
        $region17: #{tpu_custom_call.1} parent=11 // pred_check
          %p143 = pneg %p97
        $region18: #{tpu_custom_call.1} parent=11 // pred_check_branch
          %145 = sbr.rel (%p143) target = $region20
        $region19: #{tpu_custom_call.1} parent=11 // pred_region
          _
        $region20: #{tpu_custom_call.1} parent=11 // pred_fallthru
          _
      $region12: #{tpu_custom_call.1} parent=5 // pred_fallthru
        _
      %p146 = scmp.lt.s32.totalorder %s15, 2
      // Predicated region
      $region21: #{tpu_custom_call.1} parent=5 // pred_check
        %p147 = pneg %p146
      $region22: #{tpu_custom_call.1} parent=5 // pred_check_branch
        %149 = sbr.rel (%p147) target = $region24
      $region23: #{tpu_custom_call.1} parent=5 // pred_region
        // Predicated region
        $region25: #{tpu_custom_call.1} parent=23 // pred_check
          %p150 = pneg %p49
        $region26: #{tpu_custom_call.1} parent=23 // pred_check_branch
          %152 = sbr.rel (%p150) target = $region28
        $region27: #{tpu_custom_call.1} parent=23 // pred_region
          %s153 = sand.u32 %s39, 1
          %s154 = scalar_lea.sflag [#allocation3], %s153
          %s155 = sand.u32 %s39, 1
          %s156 = smul.addr %s155, 8
          %s157 = scalar_lea.vmem [#allocation2], %s156
          %s159 = ssub.s32 128, 128
          %160 = vsyncadd %s154, %s159
          %s161 = sadd.s32 %s23, %s22
          %s162 = smul.addr %s161, 128
          %s163 = scalar_lea.hbm %s0, %s162
          %s165 = sshll.u32 %s157, 4
          %s166 = int_to_ptr.vmem [resolvable:$true] %s165
          %168 = dma.hbm_to_vmem [thread:$0]  %s163, 128, %s166, %s154
        $region28: #{tpu_custom_call.1} parent=23 // pred_fallthru
          _
      $region24: #{tpu_custom_call.1} parent=5 // pred_fallthru
        _
      %p169 = scmp.le.s32.totalorder 1, %s15
      %p170 = scmp.lt.s32.totalorder %s15, 3
      %p171 = pnand %p169, %p170
      %p172 = pneg %p171
      // Predicated region
      $region29: #{tpu_custom_call.1} parent=5 // pred_check
        _
      $region30: #{tpu_custom_call.1} parent=5 // pred_check_branch
        %174 = sbr.rel (%p171) target = $region32
      $region31: #{tpu_custom_call.1} parent=5 // pred_region
        %s175 = ssub.s32 %s15, 1
        %s176 = sand.u32 %s42, 1
        %s177 = scalar_lea.sflag [#allocation3], %s176
        %s178 = sand.u32 %s42, 1
        %s179 = smul.addr %s178, 8
        %s180 = scalar_lea.vmem [#allocation2], %s179
        // Predicated region
        $region33: #{tpu_custom_call.1} parent=31 // pred_check
          %p181 = pneg %p55
        $region34: #{tpu_custom_call.1} parent=31 // pred_check_branch
          %183 = sbr.rel (%p181) target = $region36
        $region35: #{tpu_custom_call.1} parent=31 // pred_region
          %184 = dma.done %s177, 128
        $region36: #{tpu_custom_call.1} parent=31 // pred_fallthru
          _
        %s185 = sand.u32 %s42, 1
        %s186 = scalar_lea.sflag [#allocation3], %s185
        %s187 = sand.u32 %s42, 1
        %s188 = smul.addr %s187, 8
        %s189 = scalar_lea.vmem [#allocation2], %s188
        %p190 = pneg %p55
        %p191 = pneg %p52
        %p192 = pneg %p76
        %p193 = pneg %p73
        %p194 = pneg %p97
        %p195 = pneg %p94
        %p196 = pneg %p125
        %p197 = pneg %p122
        %s198 = sand.u32 %s112, 1
        %s199 = scalar_lea.sflag [#allocation4], %s198
        %s200 = sand.u32 %s112, 1
        %s201 = smul.addr %s200, 8
        %s202 = scalar_lea.vmem [#allocation5], %s201
        %v203 = vld [vmem:[%s180] sm:$0xff]
        %v204 = vmul.f32 %v203, %v203
        %v205 = vrot.slane %v204, 4
        %v206 = vadd.f32 %v204, %v205
        %v207 = vrot.slane %v206, 2
        %v208 = vadd.f32 %v206, %v207
        %v209 = vrot.slane %v208, 1
        %v210 = vadd.f32 %v208, %v209
        %v211 = vmax.f32 %v210, 1e-24
        %v212 = vrsqrt.pop %v211
        %v213 = vld [vmem:[%s1] sm:$0xff]
        %vm214 = vcmask 64512
        %v216 = vsel %vm214, %v213, 0
        %218 = vmatprep.subr.mxu0 0.0
        %219 = vmatpush1.msra.mxu0 0.0
        %220 = vmatprep.subr.mxu0 0.0
        %221 = vmatpush1.msra.mxu0 0.0
        %222 = vmatprep.subr.mxu0 0.0
        %223 = vmatpush1.msra.mxu0 0.0
        %224 = vmatprep.subr.mxu0 0.0
        %225 = vmatpush1.msra.mxu0 0.0
        %226 = vmatprep.subr.mxu0 0.0
        %227 = vmatpush1.msra.mxu0 0.0
        %228 = vmatprep.subr.mxu0 0.0
        %229 = vmatpush1.msra.mxu0 0.0
        %230 = vmatprep.subr.mxu0 0.0
        %231 = vmatpush1.msra.mxu0 0.0
        %232 = vmatprep.subr.mxu0 0.0
        %233 = vmatpush1.msra.mxu0 0.0
        %234 = vmatprep.subr.mxu0 0.0
        %235 = vmatpush1.msra.mxu0 0.0
        %236 = vmatprep.subr.mxu0 0.0
        %237 = vmatpush1.msra.mxu0 0.0
        %238 = vmatprep.subr.mxu0 0.0
        %239 = vmatpush1.msra.mxu0 0.0
        %240 = vmatprep.subr.mxu0 0.0
        %241 = vmatpush1.msra.mxu0 0.0
        %242 = vmatprep.subr.mxu0 0.0
        %243 = vmatpush1.msra.mxu0 0.0
        %244 = vmatprep.subr.mxu0 0.0
        %245 = vmatpush1.msra.mxu0 0.0
        %246 = vmatprep.subr.mxu0 0.0
        %247 = vmatpush1.msra.mxu0 0.0
        %248 = vmatprep.subr.mxu0 0.0
        %249 = vmatpush1.msra.mxu0 %v203
        %250 = vmatprep.subr.mxu0 0.0
        %251 = vmatpush2.msra.mxu0 0.0
        %252 = vmatprep.subr.mxu0 0.0
        %253 = vmatpush2.msra.mxu0 0.0
        %254 = vmatprep.subr.mxu0 0.0
        %255 = vmatpush2.msra.mxu0 0.0
        %256 = vmatprep.subr.mxu0 0.0
        %257 = vmatpush2.msra.mxu0 0.0
        %258 = vmatprep.subr.mxu0 0.0
        %259 = vmatpush2.msra.mxu0 0.0
        %260 = vmatprep.subr.mxu0 0.0
        %261 = vmatpush2.msra.mxu0 0.0
        %262 = vmatprep.subr.mxu0 0.0
        %263 = vmatpush2.msra.mxu0 0.0
        %264 = vmatprep.subr.mxu0 0.0
        %265 = vmatpush2.msra.mxu0 0.0
        %266 = vmatprep.subr.mxu0 0.0
        %267 = vmatpush2.msra.mxu0 0.0
        %268 = vmatprep.subr.mxu0 0.0
        %269 = vmatpush2.msra.mxu0 0.0
        %270 = vmatprep.subr.mxu0 0.0
        %271 = vmatpush2.msra.mxu0 0.0
        %272 = vmatprep.subr.mxu0 0.0
        %273 = vmatpush2.msra.mxu0 0.0
        %274 = vmatprep.subr.mxu0 0.0
        %275 = vmatpush2.msra.mxu0 0.0
        %276 = vmatprep.subr.mxu0 0.0
        %277 = vmatpush2.msra.mxu0 0.0
        %278 = vmatprep.subr.mxu0 0.0
        %279 = vmatpush2.msra.mxu0 0.0
        %280 = vmatprep.subr.mxu0 0.0
        %281 = vmatpush2.msra.mxu0 0.0
        %282 = vmatprep.mubr.f32.mxu0 0.0
        %283 = vmatmul.mubr.f32.gmra.mxu0 %v216
        %v284 = vpop.f32.mrf.mxu0
        %v285 = vadd.f32 0.0, %v284
        %v286 = vpop.f32.mrf.mxu0
        %287 = vdwg.mxu0
        %v288 = vmul.f32 %v285, %v212
        %v289 = vld [vmem:[%s2] sm:$0xff]
        %291 = vset.pattern.permute.xlu0 0
        %292 = vperm.xlu0 %291, %v289
        %v293 = vpop.permute.xlu0 %292
        %v295 = vadd.f32 %v288, %v293
        %296 = vst [vmem:[%s202] sm:$0xff] %v295
        %s297 = sand.u32 %s112, 1
        %s298 = scalar_lea.sflag [#allocation4], %s297
        %s299 = sand.u32 %s112, 1
        %s300 = smul.addr %s299, 8
        %s301 = scalar_lea.vmem [#allocation5], %s300
        // Predicated region
        $region37: #{tpu_custom_call.1} parent=31 // pred_check
          %p302 = pneg %p122
        $region38: #{tpu_custom_call.1} parent=31 // pred_check_branch
          %304 = sbr.rel (%p302) target = $region40
        $region39: #{tpu_custom_call.1} parent=31 // pred_region
          %s306 = ssub.s32 128, 128
          %307 = vsyncadd %s298, %s306
          %s308 = sadd.s32 %s25, %s24
          %s309 = smul.addr %s308, 128
          %s310 = scalar_lea.hbm %s3, %s309
          %s312 = sshll.u32 %s301, 4
          %s313 = int_to_ptr.vmem [resolvable:$true] %s312
          %315 = dma.vmem_to_hbm [thread:$0]  %s313, 128, %s310, %s298
        $region40: #{tpu_custom_call.1} parent=31 // pred_fallthru
          _
      $region32: #{tpu_custom_call.1} parent=5 // pred_fallthru
        _
      %p316 = scmp.le.s32.totalorder 2, %s15
      // Predicated region
      $region41: #{tpu_custom_call.1} parent=5 // pred_check
        %p317 = pneg %p316
      $region42: #{tpu_custom_call.1} parent=5 // pred_check_branch
        %319 = sbr.rel (%p317) target = $region44
      $region43: #{tpu_custom_call.1} parent=5 // pred_region
        %s320 = ssub.s32 %s15, 2
        // Predicated region
        $region45: #{tpu_custom_call.1} parent=43 // pred_check
          %p321 = pneg %p128
        $region46: #{tpu_custom_call.1} parent=43 // pred_check_branch
          %323 = sbr.rel (%p321) target = $region48
        $region47: #{tpu_custom_call.1} parent=43 // pred_region
          %s324 = sand.u32 %s113, 1
          %s325 = scalar_lea.sflag [#allocation4], %s324
          %s326 = sand.u32 %s113, 1
          %s327 = smul.addr %s326, 8
          %s328 = scalar_lea.vmem [#allocation5], %s327
          %329 = dma.done %s325, 128
        $region48: #{tpu_custom_call.1} parent=43 // pred_fallthru
          _
      $region44: #{tpu_custom_call.1} parent=5 // pred_fallthru
        _
    $region6: #{tpu_custom_call.1} parent=1 // loop_footer
      %s19 = sadd.s32 1, %s15
    $region7: #{tpu_custom_call.1} parent=1 // loop_footer_branch
      %14 = sbr.rel target = $region3
    $region8: #{tpu_custom_call.1} parent=1 // loop_exit
      _
    %330 = vsyncpa [#allocation3], 1
    %s331 = scalar_lea.sflag [#allocation3], 1
    %332 = vsyncpa %s331, 1
    %333 = vsyncpa [#allocation4], 1
    %s334 = scalar_lea.sflag [#allocation4], 1
    %335 = vsyncpa %s334, 1

</llo_original>
